<compile_context>
chip_gen: v7x
topology: tpu7x:2x2x1
jax: 0.10.0
libtpu: 0.0.40
codegen_flags: <defaults>
</compile_context>

<pallas_src>
import functools

import jax
import jax.numpy as jnp
import numpy as np
from jax.experimental import pallas as pl
from jax.experimental.pallas import tpu as pltpu


# ----------------------------------------------------------------------------
# Fused kernel: token heads (packed) + size head, one batch-block per grid step
# ----------------------------------------------------------------------------
def _fused_decoder_heads_kernel(x_ref,
                                w1t_ref, b1t_ref, w2t_ref, b2t_ref,
                                w1s_ref, b1s_ref, w2s_ref, b2s_ref,
                                packed_ref, size_ref):
    xb = x_ref[...]                              # (bB, W, F) bf16
    bB, W, F = xb.shape
    x2d = xb.reshape(bB * W, F)                  # collapse leading dims (layout-free)

    # --- per-token heads: fused (F,3H) first layer, block-diagonal (3H,8) second ---
    h = jnp.dot(x2d, w1t_ref[...], preferred_element_type=jnp.float32)
    h = jnp.maximum(h + b1t_ref[...], 0.0)       # bias + ReLU in f32
    tok = jnp.dot(h.astype(w2t_ref.dtype), w2t_ref[...],
                  preferred_element_type=jnp.float32) + b2t_ref[...]   # (bB*W, 8)
    col = jax.lax.broadcasted_iota(jnp.int32, tok.shape, 1)
    tok = jnp.where(col == 4, jax.nn.sigmoid(tok), tok)  # sigmoid only on the gt column
    packed_ref[...] = tok

    # --- size head: max-pool over the whole window W, then its own small MLP ---
    pooled = jnp.max(xb, axis=1)                 # (bB, F), matches torch.max(x, 1)[0]
    hs = jnp.dot(pooled, w1s_ref[...], preferred_element_type=jnp.float32)
    hs = jnp.maximum(hs + b1s_ref[...], 0.0)
    size_ref[...] = jnp.dot(hs.astype(w2s_ref.dtype), w2s_ref[...],
                            preferred_element_type=jnp.float32) + b2s_ref[...]


def _choose_block_b(B, W, F, bytes_per_elem=2, target_bytes=2 << 20):
    """Pick a batch block: whole B if small, else a multiple of 8 dividing B
    (keeps ~2 MiB x-tiles -> comfortably within v7x's scoped VMEM with 2x buffering)."""
    per_b = max(1, W * F * bytes_per_elem)
    target = max(1, target_bytes // per_b)
    if target >= B:
        return B
    bb = min(B, max(8, (target // 8) * 8))
    bb -= bb % 8
    while bb >= 8 and B % bb:
        bb -= 8
    return bb if bb >= 8 and B % bb == 0 else B


def decoder_heads_forward(x, params):
    """x: (B, W, F) float32.  params: dict of per-head (w1, b1, w2, b2)."""
    B, W, F = x.shape
    pc, pr, pg = params["center"], params["rotation"], params["gt"]
    ps = params["size"]
    H = pc[0].shape[1]

    # ---- pack token-head weights (tiny; folded by XLA outside the kernel) ----
    w1t = jnp.concatenate([pc[0], pr[0], pg[0]], axis=1)            # (F, 3H)
    b1t = jnp.concatenate([pc[1], pr[1], pg[1]], axis=1)            # (1, 3H)
    w2t = jnp.zeros((3 * H, 8), jnp.float32)
    w2t = (w2t.at[0:H, 0:3].set(pc[2])
               .at[H:2 * H, 3:4].set(pr[2])
               .at[2 * H:, 4:5].set(pg[2]))                         # block-diag (3H, 8)
    b2t = jnp.zeros((1, 8), jnp.float32)
    b2t = (b2t.at[:, 0:3].set(pc[3])
               .at[:, 3:4].set(pr[3])
               .at[:, 4:5].set(pg[3]))
    w1s, b1s, w2s, b2s = ps

    # bf16 matmul operands; biases stay f32 (f32 accumulation inside the kernel)
    bf = jnp.bfloat16
    x_bf = x.astype(bf)
    w1t_bf, w2t_bf = w1t.astype(bf), w2t.astype(bf)
    w1s_bf, w2s_bf = w1s.astype(bf), w2s.astype(bf)

    block_b = _choose_block_b(B, W, F)
    grid = (B // block_b,)
    N = B * W

    def _full(a):  # weights/biases: full-array block, constant index -> stay resident
        return pl.BlockSpec(a.shape, lambda i, _nd=a.ndim: (0,) * _nd)

    packed, size = pl.pallas_call(
        _fused_decoder_heads_kernel,
        grid=grid,
        in_specs=[
            pl.BlockSpec((block_b, W, F), lambda i: (i, 0, 0)),
            _full(w1t_bf), _full(b1t), _full(w2t_bf), _full(b2t),
            _full(w1s_bf), _full(b1s), _full(w2s_bf), _full(b2s),
        ],
        out_specs=(
            pl.BlockSpec((block_b * W, 8), lambda i: (i, 0)),
            pl.BlockSpec((block_b, 3), lambda i: (i, 0)),
        ),
        out_shape=(
            jax.ShapeDtypeStruct((N, 8), jnp.float32),
            jax.ShapeDtypeStruct((B, 3), jnp.float32),
        ),
        compiler_params=pltpu.CompilerParams(
            dimension_semantics=("parallel",)),
    )(x_bf, w1t_bf, b1t, w2t_bf, b2t, w1s_bf, b1s, w2s_bf, b2s)

    packed = packed.reshape(B, W, 8)
    center_out = packed[..., 0:3]
    rotation_out = packed[..., 3:4]
    score_out = packed[..., 4:5]
    return center_out, size, rotation_out, score_out


# ----------------------------------------------------------------------------
# Deterministic parameter init (mimics nn.Linear's U(-1/sqrt(fan_in), +..))
# ----------------------------------------------------------------------------
def _init_linear(key, fan_in, fan_out):
    kw, kb = jax.random.split(key)
    bound = 1.0 / np.sqrt(fan_in)
    w = jax.random.uniform(kw, (fan_in, fan_out), jnp.float32, -bound, bound)
    b = jax.random.uniform(kb, (1, fan_out), jnp.float32, -bound, bound)
    return w, b


def init_decoder_heads_params(key, in_size, out_size):
    heads = {}
    names_dims = [("center", 3), ("size", 3), ("rotation", 1), ("gt", 1)]
    keys = jax.random.split(key, 2 * len(names_dims))
    for i, (name, final_dim) in enumerate(names_dims):
        w1, b1 = _init_linear(keys[2 * i], in_size, out_size)
        w2, b2 = _init_linear(keys[2 * i + 1], out_size, final_dim)
        heads[name] = (w1, b1, w2, b2)
    return heads


# ----------------------------------------------------------------------------
# Pure-JAX reference with the same dtype plan (bf16 operands, f32 accumulate)
# ----------------------------------------------------------------------------
def _reference_forward(x, params):
    bf = jnp.bfloat16
    xb = x.astype(bf)

    def head(p, inp):
        w1, b1, w2, b2 = p
        h = jnp.dot(inp, w1.astype(bf), preferred_element_type=jnp.float32) + b1
        h = jnp.maximum(h, 0.0)
        return jnp.dot(h.astype(bf), w2.astype(bf),
                       preferred_element_type=jnp.float32) + b2

    center = head(params["center"], xb)
    rotation = head(params["rotation"], xb)
    score = jax.nn.sigmoid(head(params["gt"], xb))
    pooled = jnp.max(xb, axis=1)
    size = head(params["size"], pooled)
    return center, size, rotation, score


if __name__ == "__main__":
    B, W, F, H = 2, 8, 32, 32   # batch, window, in_size, out_size
    key = jax.random.PRNGKey(0)
    kx, kp = jax.random.split(key)
    x = jax.random.normal(kx, (B, W, F), jnp.float32)
    params = init_decoder_heads_params(kp, F, H)

    fwd = jax.jit(functools.partial(decoder_heads_forward, params=params))
    outs = jax.block_until_ready(fwd(x))

    refs = _reference_forward(x, params)
    for o, r in zip(outs, refs):
        assert o.shape == r.shape, (o.shape, r.shape)
        np.testing.assert_allclose(np.asarray(o), np.asarray(r), rtol=2e-3, atol=2e-3)

    print("KERNEL_OK")
</pallas_src>

<mosaic_0001>
module attributes {stable_mosaic.version = 11 : i64} {
  func.func @_fused_decoder_heads_kernel(%arg0: i32, %arg1: memref<2x8x32xbf16, #tpu.memory_space<vmem>>, %arg2: memref<32x96xbf16, #tpu.memory_space<vmem>>, %arg3: memref<1x96xf32, #tpu.memory_space<vmem>>, %arg4: memref<96x8xbf16, #tpu.memory_space<vmem>>, %arg5: memref<1x8xf32, #tpu.memory_space<vmem>>, %arg6: memref<32x32xbf16, #tpu.memory_space<vmem>>, %arg7: memref<1x32xf32, #tpu.memory_space<vmem>>, %arg8: memref<32x3xbf16, #tpu.memory_space<vmem>>, %arg9: memref<1x3xf32, #tpu.memory_space<vmem>>, %arg10: memref<16x8xf32, #tpu.memory_space<vmem>>, %arg11: memref<2x3xf32, #tpu.memory_space<vmem>>) attributes {dimension_semantics = [#tpu.dimension_semantics<parallel>], iteration_bounds = array<i64: 1>, scalar_prefetch = 0 : i64, scratch_operands = 0 : i64, tpu.core_type = #tpu.core_type<tc>, window_params = [{transform_indices = @transform_0, window_bounds = array<i64: 2, 8, 32>}, {pipeline_mode = #tpu.pipeline_mode<synchronous>, transform_indices = @transform_1, window_bounds = array<i64: 32, 96>}, {pipeline_mode = #tpu.pipeline_mode<synchronous>, transform_indices = @transform_2, window_bounds = array<i64: 1, 96>}, {pipeline_mode = #tpu.pipeline_mode<synchronous>, transform_indices = @transform_3, window_bounds = array<i64: 96, 8>}, {pipeline_mode = #tpu.pipeline_mode<synchronous>, transform_indices = @transform_4, window_bounds = array<i64: 1, 8>}, {pipeline_mode = #tpu.pipeline_mode<synchronous>, transform_indices = @transform_5, window_bounds = array<i64: 32, 32>}, {pipeline_mode = #tpu.pipeline_mode<synchronous>, transform_indices = @transform_6, window_bounds = array<i64: 1, 32>}, {pipeline_mode = #tpu.pipeline_mode<synchronous>, transform_indices = @transform_7, window_bounds = array<i64: 32, 3>}, {pipeline_mode = #tpu.pipeline_mode<synchronous>, transform_indices = @transform_8, window_bounds = array<i64: 1, 3>}, {transform_indices = @transform_9, window_bounds = array<i64: 16, 8>}, {transform_indices = @transform_10, window_bounds = array<i64: 2, 3>}]} {
    %c0 = arith.constant 0 : index
    %c0_0 = arith.constant 0 : index
    %c0_1 = arith.constant 0 : index
    %0 = vector.load %arg1[%c0, %c0_0, %c0_1] : memref<2x8x32xbf16, #tpu.memory_space<vmem>>, vector<2x8x32xbf16>
    %1 = vector.shape_cast %0 : vector<2x8x32xbf16> to vector<16x32xbf16>
    %c0_2 = arith.constant 0 : index
    %c0_3 = arith.constant 0 : index
    %2 = vector.load %arg2[%c0_2, %c0_3] : memref<32x96xbf16, #tpu.memory_space<vmem>>, vector<32x96xbf16>
    %cst = arith.constant dense<0.000000e+00> : vector<16x96xf32>
    %3 = tpu.matmul %1, %2, %cst {dimension_numbers = #tpu.dot_dimension_numbers<[1], [0], [0], [1], [0, 0, 1, 1], [], []>} : vector<16x32xbf16>, vector<32x96xbf16>, vector<16x96xf32> -> vector<16x96xf32>
    %c0_4 = arith.constant 0 : index
    %c0_5 = arith.constant 0 : index
    %4 = vector.load %arg3[%c0_4, %c0_5] : memref<1x96xf32, #tpu.memory_space<vmem>>, vector<1x96xf32>
    %5 = vector.broadcast %4 : vector<1x96xf32> to vector<16x96xf32>
    %6 = arith.addf %3, %5 : vector<16x96xf32>
    %cst_6 = arith.constant 0.000000e+00 : f32
    %7 = vector.broadcast %cst_6 : f32 to vector<16x96xf32>
    %8 = arith.maximumf %6, %7 : vector<16x96xf32>
    %9 = arith.truncf %8 : vector<16x96xf32> to vector<16x96xbf16>
    %c0_7 = arith.constant 0 : index
    %c0_8 = arith.constant 0 : index
    %10 = vector.load %arg4[%c0_7, %c0_8] : memref<96x8xbf16, #tpu.memory_space<vmem>>, vector<96x8xbf16>
    %cst_9 = arith.constant dense<0.000000e+00> : vector<16x8xf32>
    %11 = tpu.matmul %9, %10, %cst_9 {dimension_numbers = #tpu.dot_dimension_numbers<[1], [0], [0], [1], [0, 0, 1, 1], [], []>} : vector<16x96xbf16>, vector<96x8xbf16>, vector<16x8xf32> -> vector<16x8xf32>
    %c0_10 = arith.constant 0 : index
    %c0_11 = arith.constant 0 : index
    %12 = vector.load %arg5[%c0_10, %c0_11] : memref<1x8xf32, #tpu.memory_space<vmem>>, vector<1x8xf32>
    %13 = vector.broadcast %12 : vector<1x8xf32> to vector<16x8xf32>
    %14 = arith.addf %11, %13 : vector<16x8xf32>
    %15 = tpu.iota {dimensions = array<i32: 1>} : vector<16x8xi32>
    %c4_i32 = arith.constant 4 : i32
    %16 = vector.broadcast %c4_i32 : i32 to vector<16x8xi32>
    %17 = arith.cmpi eq, %15, %16 : vector<16x8xi32>
    %18 = arith.negf %14 : vector<16x8xf32>
    %19 = math.exp %18 : vector<16x8xf32>
    %cst_12 = arith.constant 1.000000e+00 : f32
    %20 = vector.broadcast %cst_12 : f32 to vector<16x8xf32>
    %21 = arith.addf %20, %19 : vector<16x8xf32>
    %22 = arith.divf %20, %21 : vector<16x8xf32>
    %23 = arith.select %17, %22, %14 : vector<16x8xi1>, vector<16x8xf32>
    %c0_13 = arith.constant 0 : index
    %c0_14 = arith.constant 0 : index
    %24 = vector.load %arg10[%c0_13, %c0_14] : memref<16x8xf32, #tpu.memory_space<vmem>>, vector<16x8xf32>
    tpu.vector_store %arg10[%c0_13, %c0_14], %23 {strides = array<i32>} : memref<16x8xf32, #tpu.memory_space<vmem>>, vector<16x8xf32>,
    %cst_15 = arith.constant dense<0xFF80> : vector<2x32xbf16>
    %25 = vector.multi_reduction <maximumf>, %0, %cst_15 [1] : vector<2x8x32xbf16> to vector<2x32xbf16>
    %c0_16 = arith.constant 0 : index
    %c0_17 = arith.constant 0 : index
    %26 = vector.load %arg6[%c0_16, %c0_17] : memref<32x32xbf16, #tpu.memory_space<vmem>>, vector<32x32xbf16>
    %cst_18 = arith.constant dense<0.000000e+00> : vector<2x32xf32>
    %27 = tpu.matmul %25, %26, %cst_18 {dimension_numbers = #tpu.dot_dimension_numbers<[1], [0], [0], [1], [0, 0, 1, 1], [], []>} : vector<2x32xbf16>, vector<32x32xbf16>, vector<2x32xf32> -> vector<2x32xf32>
    %c0_19 = arith.constant 0 : index
    %c0_20 = arith.constant 0 : index
    %28 = vector.load %arg7[%c0_19, %c0_20] : memref<1x32xf32, #tpu.memory_space<vmem>>, vector<1x32xf32>
    %29 = vector.broadcast %28 : vector<1x32xf32> to vector<2x32xf32>
    %30 = arith.addf %27, %29 : vector<2x32xf32>
    %cst_21 = arith.constant 0.000000e+00 : f32
    %31 = vector.broadcast %cst_21 : f32 to vector<2x32xf32>
    %32 = arith.maximumf %30, %31 : vector<2x32xf32>
    %33 = arith.truncf %32 : vector<2x32xf32> to vector<2x32xbf16>
    %c0_22 = arith.constant 0 : index
    %c0_23 = arith.constant 0 : index
    %34 = vector.load %arg8[%c0_22, %c0_23] : memref<32x3xbf16, #tpu.memory_space<vmem>>, vector<32x3xbf16>
    %cst_24 = arith.constant dense<0.000000e+00> : vector<2x3xf32>
    %35 = tpu.matmul %33, %34, %cst_24 {dimension_numbers = #tpu.dot_dimension_numbers<[1], [0], [0], [1], [0, 0, 1, 1], [], []>} : vector<2x32xbf16>, vector<32x3xbf16>, vector<2x3xf32> -> vector<2x3xf32>
    %c0_25 = arith.constant 0 : index
    %c0_26 = arith.constant 0 : index
    %36 = vector.load %arg9[%c0_25, %c0_26] : memref<1x3xf32, #tpu.memory_space<vmem>>, vector<1x3xf32>
    %37 = vector.broadcast %36 : vector<1x3xf32> to vector<2x3xf32>
    %38 = arith.addf %35, %37 : vector<2x3xf32>
    %c0_27 = arith.constant 0 : index
    %c0_28 = arith.constant 0 : index
    %39 = vector.load %arg11[%c0_27, %c0_28] : memref<2x3xf32, #tpu.memory_space<vmem>>, vector<2x3xf32>
    tpu.vector_store %arg11[%c0_27, %c0_28], %38 {strides = array<i32>} : memref<2x3xf32, #tpu.memory_space<vmem>>, vector<2x3xf32>,
    return
  }
  func.func @transform_0(%arg0: i32) -> (i32, i32, i32) {
    %c0_i32 = arith.constant 0 : i32
    %c0_i32_0 = arith.constant 0 : i32
    %c0_i32_1 = arith.constant 0 : i32
    return %arg0, %c0_i32, %c0_i32_0 : i32, i32, i32
  }
  func.func @transform_1(%arg0: i32) -> (i32, i32) {
    %c0_i32 = arith.constant 0 : i32
    %c0_i32_0 = arith.constant 0 : i32
    %c0_i32_1 = arith.constant 0 : i32
    return %c0_i32, %c0_i32_0 : i32, i32
  }
  func.func @transform_2(%arg0: i32) -> (i32, i32) {
    %c0_i32 = arith.constant 0 : i32
    %c0_i32_0 = arith.constant 0 : i32
    %c0_i32_1 = arith.constant 0 : i32
    return %c0_i32, %c0_i32_0 : i32, i32
  }
  func.func @transform_3(%arg0: i32) -> (i32, i32) {
    %c0_i32 = arith.constant 0 : i32
    %c0_i32_0 = arith.constant 0 : i32
    %c0_i32_1 = arith.constant 0 : i32
    return %c0_i32, %c0_i32_0 : i32, i32
  }
  func.func @transform_4(%arg0: i32) -> (i32, i32) {
    %c0_i32 = arith.constant 0 : i32
    %c0_i32_0 = arith.constant 0 : i32
    %c0_i32_1 = arith.constant 0 : i32
    return %c0_i32, %c0_i32_0 : i32, i32
  }
  func.func @transform_5(%arg0: i32) -> (i32, i32) {
    %c0_i32 = arith.constant 0 : i32
    %c0_i32_0 = arith.constant 0 : i32
    %c0_i32_1 = arith.constant 0 : i32
    return %c0_i32, %c0_i32_0 : i32, i32
  }
  func.func @transform_6(%arg0: i32) -> (i32, i32) {
    %c0_i32 = arith.constant 0 : i32
    %c0_i32_0 = arith.constant 0 : i32
    %c0_i32_1 = arith.constant 0 : i32
    return %c0_i32, %c0_i32_0 : i32, i32
  }
  func.func @transform_7(%arg0: i32) -> (i32, i32) {
    %c0_i32 = arith.constant 0 : i32
    %c0_i32_0 = arith.constant 0 : i32
    %c0_i32_1 = arith.constant 0 : i32
    return %c0_i32, %c0_i32_0 : i32, i32
  }
  func.func @transform_8(%arg0: i32) -> (i32, i32) {
    %c0_i32 = arith.constant 0 : i32
    %c0_i32_0 = arith.constant 0 : i32
    %c0_i32_1 = arith.constant 0 : i32
    return %c0_i32, %c0_i32_0 : i32, i32
  }
  func.func @transform_9(%arg0: i32) -> (i32, i32) {
    %c0_i32 = arith.constant 0 : i32
    %c0_i32_0 = arith.constant 0 : i32
    return %arg0, %c0_i32 : i32, i32
  }
  func.func @transform_10(%arg0: i32) -> (i32, i32) {
    %c0_i32 = arith.constant 0 : i32
    %c0_i32_0 = arith.constant 0 : i32
    return %arg0, %c0_i32 : i32, i32
  }
}

</mosaic_0001>

<llo_original>
// kernel: decoder_heads_forward.1
$region0: #{decoder_heads_forward.1}
  #allocation0 [shape = 'u32[]', space=smem, size = 0x4, offset = 0x4, fixed_abs, tag = 'smem constant byte address 0x4 - core index']
  #allocation1 [shape = 'u32[144,128]{1,0:T(1,128)}', space=vmem, size = 0x12000, scoped, tag = 'internal scratch']
  %s0 = inlined_call_operand.vmem [shape: bf16[2,8,32], index: 0, kind: input, shape index: {}]
  %s1 = inlined_call_operand.vmem [shape: bf16[32,96], index: 1, kind: input, shape index: {}]
  %s2 = inlined_call_operand.hbm [shape: f32[1,96], index: 2, kind: input, shape index: {}]
  %s3 = inlined_call_operand.vmem [shape: bf16[96,8], index: 3, kind: input, shape index: {}]
  %s4 = inlined_call_operand.vmem [shape: f32[1,8], index: 4, kind: input, shape index: {}]
  %s5 = inlined_call_operand.vmem [shape: bf16[32,32], index: 5, kind: input, shape index: {}]
  %s6 = inlined_call_operand.hbm [shape: f32[1,32], index: 6, kind: input, shape index: {}]
  %s7 = inlined_call_operand.vmem [shape: bf16[32,3], index: 7, kind: input, shape index: {}]
  %s8 = inlined_call_operand.hbm [shape: f32[1,3], index: 8, kind: input, shape index: {}]
  %s9 = inlined_call_operand.vmem [shape: f32[16,8], index: 9, kind: output, shape index: {0}]
  %s10 = inlined_call_operand.hbm [shape: f32[2,3], index: 10, kind: output, shape index: {1}]
  %11 = xla_tuple %s9, %s10
  %s12 = sld [smem:[#allocation0]]
  $region66: #{decoder_heads_forward.1} parent=0
    _
  %s14 = ssub.s32 1, %s12
  %s15 = scalar_select 0, %s14, %s12
  $region1: #{decoder_heads_forward.1} parent=0
    #allocation2 [shape = 'u8[512]{0}', space=vmem, size = 0x400, scoped, tag = 'input window, operand 2, single buffered']
    #allocation3 [shape = 's32[1]{0}', space=sflag, size = 0x4, scoped, tag = 'scoped memory for decoder_heads_forward.1']
    #allocation4 [shape = 's32[1]{0}', space=sflag, size = 0x4, scoped, tag = 'scoped memory for decoder_heads_forward.1']
    #allocation5 [shape = 'u8[512]{0}', space=vmem, size = 0x400, scoped, tag = 'input window, operand 6, single buffered']
    #allocation6 [shape = 's32[1]{0}', space=sflag, size = 0x4, scoped, tag = 'scoped memory for decoder_heads_forward.1']
    #allocation7 [shape = 'u8[512]{0}', space=vmem, size = 0x400, scoped, tag = 'input window, operand 8, single buffered']
    #allocation8 [shape = 'u8[1024]{0}', space=vmem, size = 0x400, scoped, tag = 'output window, operand 1, single buffered']
    %16 = vsyncpa [#allocation3], 0
    %17 = vsyncpa [#allocation6], 0
    %18 = vsyncpa [#allocation4], 0
    // Predicated region
    $region2: #{decoder_heads_forward.1} parent=1 // pred_check
      _
    $region3: #{decoder_heads_forward.1} parent=1 // pred_check_branch
      %20 = sbr.rel (0) target = $region5
    $region4: #{decoder_heads_forward.1} parent=1 // pred_region
      _
    $region5: #{decoder_heads_forward.1} parent=1 // pred_fallthru
      _
    // Predicated region
    $region6: #{decoder_heads_forward.1} parent=1 // pred_check
      _
    $region7: #{decoder_heads_forward.1} parent=1 // pred_check_branch
      %22 = sbr.rel (0) target = $region9
    $region8: #{decoder_heads_forward.1} parent=1 // pred_region
      _
    $region9: #{decoder_heads_forward.1} parent=1 // pred_fallthru
      _
    // Predicated region
    $region10: #{decoder_heads_forward.1} parent=1 // pred_check
      _
    $region11: #{decoder_heads_forward.1} parent=1 // pred_check_branch
      %24 = sbr.rel (0) target = $region13
    $region12: #{decoder_heads_forward.1} parent=1 // pred_region
      %s26 = ssub.s32 16, 16
      %27 = vsyncadd [#allocation3], %s26
      %s29 = sshll.u32 [#allocation2], 4
      %s30 = int_to_ptr.vmem [resolvable:$true] %s29
      %32 = dma.hbm_to_vmem [thread:$0]  %s2, 16, %s30, [#allocation3]
    $region13: #{decoder_heads_forward.1} parent=1 // pred_fallthru
      _
    // Predicated region
    $region14: #{decoder_heads_forward.1} parent=1 // pred_check
      _
    $region15: #{decoder_heads_forward.1} parent=1 // pred_check_branch
      %34 = sbr.rel (0) target = $region17
    $region16: #{decoder_heads_forward.1} parent=1 // pred_region
      _
    $region17: #{decoder_heads_forward.1} parent=1 // pred_fallthru
      _
    // Predicated region
    $region18: #{decoder_heads_forward.1} parent=1 // pred_check
      _
    $region19: #{decoder_heads_forward.1} parent=1 // pred_check_branch
      %36 = sbr.rel (0) target = $region21
    $region20: #{decoder_heads_forward.1} parent=1 // pred_region
      _
    $region21: #{decoder_heads_forward.1} parent=1 // pred_fallthru
      _
    // Predicated region
    $region22: #{decoder_heads_forward.1} parent=1 // pred_check
      _
    $region23: #{decoder_heads_forward.1} parent=1 // pred_check_branch
      %38 = sbr.rel (0) target = $region25
    $region24: #{decoder_heads_forward.1} parent=1 // pred_region
      _
    $region25: #{decoder_heads_forward.1} parent=1 // pred_fallthru
      _
    // Predicated region
    $region26: #{decoder_heads_forward.1} parent=1 // pred_check
      _
    $region27: #{decoder_heads_forward.1} parent=1 // pred_check_branch
      %40 = sbr.rel (0) target = $region29
    $region28: #{decoder_heads_forward.1} parent=1 // pred_region
      %s42 = ssub.s32 16, 16
      %43 = vsyncadd [#allocation6], %s42
      %s45 = sshll.u32 [#allocation5], 4
      %s46 = int_to_ptr.vmem [resolvable:$true] %s45
      %48 = dma.hbm_to_vmem [thread:$0]  %s6, 16, %s46, [#allocation6]
    $region29: #{decoder_heads_forward.1} parent=1 // pred_fallthru
      _
    // Predicated region
    $region30: #{decoder_heads_forward.1} parent=1 // pred_check
      _
    $region31: #{decoder_heads_forward.1} parent=1 // pred_check_branch
      %50 = sbr.rel (0) target = $region33
    $region32: #{decoder_heads_forward.1} parent=1 // pred_region
      _
    $region33: #{decoder_heads_forward.1} parent=1 // pred_fallthru
      _
    // Predicated region
    $region34: #{decoder_heads_forward.1} parent=1 // pred_check
      _
    $region35: #{decoder_heads_forward.1} parent=1 // pred_check_branch
      %52 = sbr.rel (0) target = $region37
    $region36: #{decoder_heads_forward.1} parent=1 // pred_region
      %s54 = ssub.s32 16, 16
      %55 = vsyncadd [#allocation6], %s54
      %s57 = sshll.u32 [#allocation7], 4
      %s58 = int_to_ptr.vmem [resolvable:$true] %s57
      %60 = dma.hbm_to_vmem [thread:$0]  %s8, 16, %s58, [#allocation6]
    $region37: #{decoder_heads_forward.1} parent=1 // pred_fallthru
      _
    // Predicated region
    $region38: #{decoder_heads_forward.1} parent=1 // pred_check
      _
    $region39: #{decoder_heads_forward.1} parent=1 // pred_check_branch
      %62 = sbr.rel (0) target = $region41
    $region40: #{decoder_heads_forward.1} parent=1 // pred_region
      %63 = dma.done [#allocation3], 16
    $region41: #{decoder_heads_forward.1} parent=1 // pred_fallthru
      _
    // Predicated region
    $region42: #{decoder_heads_forward.1} parent=1 // pred_check
      _
    $region43: #{decoder_heads_forward.1} parent=1 // pred_check_branch
      %65 = sbr.rel (0) target = $region45
    $region44: #{decoder_heads_forward.1} parent=1 // pred_region
      %66 = dma.done [#allocation6], 16
    $region45: #{decoder_heads_forward.1} parent=1 // pred_fallthru
      _
    // Predicated region
    $region46: #{decoder_heads_forward.1} parent=1 // pred_check
      _
    $region47: #{decoder_heads_forward.1} parent=1 // pred_check_branch
      %68 = sbr.rel (0) target = $region49
    $region48: #{decoder_heads_forward.1} parent=1 // pred_region
      %69 = dma.done [#allocation6], 16
    $region49: #{decoder_heads_forward.1} parent=1 // pred_fallthru
      _
    %v72 = vld [vmem:[%s0] sm:$0xf]
    %v73 = vld [vmem:[%s0 + $0x4] sm:$0xf]
    %v74 = vld [vmem:[%s1] sm:$0xf]
    %v75 = vld [vmem:[%s1 + $0x4] sm:$0xf]
    %v76 = vld [vmem:[%s1 + $0x8] sm:$0xf]
    %v77 = vld [vmem:[%s1 + $0xc] sm:$0xf]
    %v78 = vld [vmem:[#allocation2] sm:$0x1]
    %v80 = vlaneseq
    %v81 = vshrl.u32 %v80, 7
    %v82 = vsub.s32 0, %v81
    %v83 = vrot.slane %v78, %v82
    %v87 = vunpack.c.l.b16 %v72
    %v88 = vunpack.c.l.b16 %v73
    %v89 = vpack.c.b16 %v88, %v87
    %v94 = vunpack.c.l.b16 %v74
    %v95 = vunpack.c.l.b16 %v75
    %v96 = vunpack.c.l.b16 %v76
    %v97 = vunpack.c.l.b16 %v77
    %v98 = vpack.c.b16 %v95, %v94
    %v99 = vpack.c.b16 %v97, %v96
    %vm102 = vcmask 261120
    %v104 = vsel %vm102, %v89, 0
    %106 = vmatprep.subr.bf16.mxu0 0
    %107 = vmatpush1.bf16.msra.mxu0 %v98
    %108 = vmatprep.subr.bf16.mxu0 0
    %109 = vmatpush1.bf16.msra.mxu0 %v99
    %110 = vmatprep.subr.bf16.mxu0 0
    %111 = vmatpush1.bf16.msra.mxu0 0
    %112 = vmatprep.subr.bf16.mxu0 0
    %113 = vmatpush1.bf16.msra.mxu0 0
    %114 = vmatprep.subr.bf16.mxu0 0
    %115 = vmatpush1.bf16.msra.mxu0 0
    %116 = vmatprep.subr.bf16.mxu0 0
    %117 = vmatpush1.bf16.msra.mxu0 0
    %118 = vmatprep.subr.bf16.mxu0 0
    %119 = vmatpush1.bf16.msra.mxu0 0
    %120 = vmatprep.subr.bf16.mxu0 0
    %121 = vmatpush1.bf16.msra.mxu0 0
    %122 = vmatprep.subr.bf16.mxu0 0
    %123 = vmatpush1.bf16.msra.mxu0 0
    %124 = vmatprep.subr.bf16.mxu0 0
    %125 = vmatpush1.bf16.msra.mxu0 0
    %126 = vmatprep.subr.bf16.mxu0 0
    %127 = vmatpush1.bf16.msra.mxu0 0
    %128 = vmatprep.subr.bf16.mxu0 0
    %129 = vmatpush1.bf16.msra.mxu0 0
    %130 = vmatprep.subr.bf16.mxu0 0
    %131 = vmatpush1.bf16.msra.mxu0 0
    %132 = vmatprep.subr.bf16.mxu0 0
    %133 = vmatpush1.bf16.msra.mxu0 0
    %134 = vmatprep.subr.bf16.mxu0 0
    %135 = vmatpush1.bf16.msra.mxu0 0
    %136 = vmatprep.subr.bf16.mxu0 0
    %137 = vmatpush1.bf16.msra.mxu0 0
    %138 = vmatprep.mubr.bf16.mxu0 0
    %139 = vmatmul.mubr.bf16.gmra.mrb[0].mxu0 %v104
    %v140 = vpop.f32.mrb[0].mxu0
    %v141 = vadd.f32 %v83, %v140
    %v142 = vpop.f32.mrb[0].mxu0
    %v143 = vpop.f32.mrb[0].mxu0
    %v144 = vadd.f32 %v83, %v143
    %v145 = vpop.f32.mrb[0].mxu0
    %146 = vdwg.mxu0
    %v147 = vmax.f32 %v141, 0.0
    %v148 = vmax.f32 %v144, 0.0
    %v149 = vpack.c.bf16 %v148, %v147
    %v150 = vld [vmem:[%s3] sm:$0xf]
    %v151 = vld [vmem:[%s3 + $0x4] sm:$0xf]
    %v152 = vld [vmem:[%s3 + $0x8] sm:$0xf]
    %v153 = vld [vmem:[%s3 + $0xc] sm:$0xf]
    %v154 = vld [vmem:[%s3 + $0x10] sm:$0xf]
    %v155 = vld [vmem:[%s3 + $0x14] sm:$0xf]
    %v156 = vld [vmem:[%s3 + $0x18] sm:$0xf]
    %v157 = vld [vmem:[%s3 + $0x1c] sm:$0xf]
    %v158 = vld [vmem:[%s3 + $0x20] sm:$0xf]
    %v159 = vld [vmem:[%s3 + $0x24] sm:$0xf]
    %v160 = vld [vmem:[%s3 + $0x28] sm:$0xf]
    %v161 = vld [vmem:[%s3 + $0x2c] sm:$0xf]
    %v162 = vld [vmem:[%s4] sm:$0x1]
    %v164 = vlaneseq
    %v165 = vshrl.u32 %v164, 7
    %v166 = vsub.s32 0, %v165
    %v167 = vrot.slane %v162, %v166
    %v181 = vunpack.c.l.b16 %v150
    %v182 = vunpack.c.l.b16 %v151
    %v183 = vunpack.c.l.b16 %v152
    %v184 = vunpack.c.l.b16 %v153
    %v185 = vunpack.c.l.b16 %v154
    %v186 = vunpack.c.l.b16 %v155
    %v187 = vunpack.c.l.b16 %v156
    %v188 = vunpack.c.l.b16 %v157
    %v189 = vunpack.c.l.b16 %v158
    %v190 = vunpack.c.l.b16 %v159
    %v191 = vunpack.c.l.b16 %v160
    %v192 = vunpack.c.l.b16 %v161
    %v193 = vpack.c.b16 %v182, %v181
    %v194 = vpack.c.b16 %v184, %v183
    %v195 = vpack.c.b16 %v186, %v185
    %v196 = vpack.c.b16 %v188, %v187
    %v197 = vpack.c.b16 %v190, %v189
    %v198 = vpack.c.b16 %v192, %v191
    %vm205 = vcmask 785408
    %v207 = vsel %vm205, %v149, 0
    %209 = vmatprep.subr.bf16.mxu0 0
    %210 = vmatpush1.bf16.msra.mxu0 %v193
    %211 = vmatprep.subr.bf16.mxu0 0
    %212 = vmatpush1.bf16.msra.mxu0 %v194
    %213 = vmatprep.subr.bf16.mxu0 0
    %214 = vmatpush1.bf16.msra.mxu0 %v195
    %215 = vmatprep.subr.bf16.mxu0 0
    %216 = vmatpush1.bf16.msra.mxu0 %v196
    %217 = vmatprep.subr.bf16.mxu0 0
    %218 = vmatpush1.bf16.msra.mxu0 %v197
    %219 = vmatprep.subr.bf16.mxu0 0
    %220 = vmatpush1.bf16.msra.mxu0 %v198
    %221 = vmatprep.subr.bf16.mxu0 0
    %222 = vmatpush1.bf16.msra.mxu0 0
    %223 = vmatprep.subr.bf16.mxu0 0
    %224 = vmatpush1.bf16.msra.mxu0 0
    %225 = vmatprep.subr.bf16.mxu0 0
    %226 = vmatpush1.bf16.msra.mxu0 0
    %227 = vmatprep.subr.bf16.mxu0 0
    %228 = vmatpush1.bf16.msra.mxu0 0
    %229 = vmatprep.subr.bf16.mxu0 0
    %230 = vmatpush1.bf16.msra.mxu0 0
    %231 = vmatprep.subr.bf16.mxu0 0
    %232 = vmatpush1.bf16.msra.mxu0 0
    %233 = vmatprep.subr.bf16.mxu0 0
    %234 = vmatpush1.bf16.msra.mxu0 0
    %235 = vmatprep.subr.bf16.mxu0 0
    %236 = vmatpush1.bf16.msra.mxu0 0
    %237 = vmatprep.subr.bf16.mxu0 0
    %238 = vmatpush1.bf16.msra.mxu0 0
    %239 = vmatprep.subr.bf16.mxu0 0
    %240 = vmatpush1.bf16.msra.mxu0 0
    %241 = vmatprep.mubr.bf16.mxu0 0
    %242 = vmatmul.mubr.bf16.gmra.mrb[0].mxu0 %v207
    %v243 = vpop.f32.mrb[0].mxu0
    %v244 = vadd.f32 %v167, %v243
    %v245 = vpop.f32.mrb[0].mxu0
    %v246 = vpop.f32.mrb[0].mxu0
    %v247 = vadd.f32 %v167, %v246
    %v248 = vpop.f32.mrb[0].mxu0
    %249 = vdwg.mxu0
    %v250 = vlaneseq
    %v251 = vand.u32 %v250, 127
    %vm252 = vcmp.eq.s32.totalorder %v251, 4
    %v253 = vxor.u32 %v244, 2147483648
    %v254 = vxor.u32 %v247, 2147483648
    %v255 = vmul.f32 %v253, 1.442695
    %v256 = vpow.pop %v255
    %v257 = vmul.f32 %v254, 1.442695
    %v258 = vpow.pop %v257
    %v259 = vadd.f32 %v256, 1.0
    %v260 = vadd.f32 %v258, 1.0
    %v261 = vrcp.pop %v259
    %v262 = vmul.f32 1.0, %v261
    %v263 = vrcp.pop %v260
    %v264 = vmul.f32 1.0, %v263
    %v265 = vsel %vm252, %v262, %v244
    %v266 = vsel %vm252, %v264, %v247
    %vm267 = vcmask 64512
    %268 = vst.msk [vmem:[%s9] sm:$0xff] %vm267, %v265
    %269 = vst.msk [vmem:[%s9 + $0x8] sm:$0xff] %vm267, %v266
    %vm270 = vcmask 257024
    %v273 = vsel %vm270, %v72, 4286644096
    %v275 = vunpack.i.l.bf16 %v273
    %v276 = vunpack.i.h.bf16 %v273
    %v277 = vmax.f32 %v275, %v276
    %v278 = vrot.slane %v277, 4
    %v279 = vmax.f32 %v277, %v278
    %v280 = vrot.slane %v279, 2
    %v281 = vmax.f32 %v279, %v280
    %v282 = vrot.slane %v281, 1
    %v283 = vmax.f32 %v281, %v282
    %v284 = vpack.i.bf16 %v283, %v283
    %v286 = vsel %vm270, %v73, 4286644096
    %v288 = vunpack.i.l.bf16 %v286
    %v289 = vunpack.i.h.bf16 %v286
    %v290 = vmax.f32 %v288, %v289
    %v291 = vrot.slane %v290, 4
    %v292 = vmax.f32 %v290, %v291
    %v293 = vrot.slane %v292, 2
    %v294 = vmax.f32 %v292, %v293
    %v295 = vrot.slane %v294, 1
    %v296 = vmax.f32 %v294, %v295
    %v297 = vpack.i.bf16 %v296, %v296
    %v298 = vld [vmem:[%s5] sm:$0xf]
    %v299 = vld [vmem:[%s5 + $0x4] sm:$0xf]
    %v300 = vld [vmem:[%s5 + $0x8] sm:$0xf]
    %v301 = vld [vmem:[%s5 + $0xc] sm:$0xf]
    %v302 = vld [vmem:[#allocation5] sm:$0x1]
    %v304 = vlaneseq
    %v305 = vshrl.u32 %v304, 7
    %v306 = vsub.s32 0, %v305
    %v307 = vrot.slane %v302, %v306
    %v311 = vunpack.c.l.b16 %v284
    %v312 = vunpack.c.l.b16 %v297
    %vm313 = vcmask 1041409
    %v314 = vsel %vm313, %v312, %v311
    %v315 = vpack.c.b16 %v314, %v314
    %v320 = vunpack.c.l.b16 %v298
    %v321 = vunpack.c.l.b16 %v299
    %v322 = vunpack.c.l.b16 %v300
    %v323 = vunpack.c.l.b16 %v301
    %v324 = vpack.c.b16 %v321, %v320
    %v325 = vpack.c.b16 %v323, %v322
    %v329 = vsel %vm102, %v315, 0
    %331 = vmatprep.subr.bf16.mxu0 0
    %332 = vmatpush1.bf16.msra.mxu0 %v324
    %333 = vmatprep.subr.bf16.mxu0 0
    %334 = vmatpush1.bf16.msra.mxu0 %v325
    %335 = vmatprep.subr.bf16.mxu0 0
    %336 = vmatpush1.bf16.msra.mxu0 0
    %337 = vmatprep.subr.bf16.mxu0 0
    %338 = vmatpush1.bf16.msra.mxu0 0
    %339 = vmatprep.subr.bf16.mxu0 0
    %340 = vmatpush1.bf16.msra.mxu0 0
    %341 = vmatprep.subr.bf16.mxu0 0
    %342 = vmatpush1.bf16.msra.mxu0 0
    %343 = vmatprep.subr.bf16.mxu0 0
    %344 = vmatpush1.bf16.msra.mxu0 0
    %345 = vmatprep.subr.bf16.mxu0 0
    %346 = vmatpush1.bf16.msra.mxu0 0
    %347 = vmatprep.subr.bf16.mxu0 0
    %348 = vmatpush1.bf16.msra.mxu0 0
    %349 = vmatprep.subr.bf16.mxu0 0
    %350 = vmatpush1.bf16.msra.mxu0 0
    %351 = vmatprep.subr.bf16.mxu0 0
    %352 = vmatpush1.bf16.msra.mxu0 0
    %353 = vmatprep.subr.bf16.mxu0 0
    %354 = vmatpush1.bf16.msra.mxu0 0
    %355 = vmatprep.subr.bf16.mxu0 0
    %356 = vmatpush1.bf16.msra.mxu0 0
    %357 = vmatprep.subr.bf16.mxu0 0
    %358 = vmatpush1.bf16.msra.mxu0 0
    %359 = vmatprep.subr.bf16.mxu0 0
    %360 = vmatpush1.bf16.msra.mxu0 0
    %361 = vmatprep.subr.bf16.mxu0 0
    %362 = vmatpush1.bf16.msra.mxu0 0
    %363 = vmatprep.mubr.bf16.mxu0 0
    %364 = vmatmul.mubr.bf16.gmra.mrb[0].mxu0 %v329
    %v365 = vpop.f32.mrb[0].mxu0
    %v366 = vadd.f32 %v307, %v365
    %v367 = vpop.f32.mrb[0].mxu0
    %v368 = vpop.f32.mrb[0].mxu0
    %v369 = vpop.f32.mrb[0].mxu0
    %370 = vdwg.mxu0
    %v371 = vmax.f32 %v366, 0.0
    %v372 = vpack.c.bf16 %v371, %v371
    %v373 = vld [vmem:[%s7] sm:$0xf]
    %v374 = vld [vmem:[%s7 + $0x4] sm:$0xf]
    %v375 = vld [vmem:[%s7 + $0x8] sm:$0xf]
    %v376 = vld [vmem:[%s7 + $0xc] sm:$0xf]
    %v377 = vld [vmem:[#allocation7] sm:$0x1]
    %v379 = vlaneseq
    %v380 = vshrl.u32 %v379, 7
    %v381 = vsub.s32 0, %v380
    %v382 = vrot.slane %v377, %v381
    %v388 = vunpack.c.l.b16 %v373
    %v389 = vunpack.c.l.b16 %v374
    %v390 = vunpack.c.l.b16 %v375
    %v391 = vunpack.c.l.b16 %v376
    %v392 = vpack.c.b16 %v389, %v388
    %v393 = vpack.c.b16 %v391, %v390
    %v397 = vsel %vm102, %v372, 0
    %399 = vmatprep.subr.bf16.mxu0 0
    %400 = vmatpush1.bf16.msra.mxu0 %v392
    %401 = vmatprep.subr.bf16.mxu0 0
    %402 = vmatpush1.bf16.msra.mxu0 %v393
    %403 = vmatprep.subr.bf16.mxu0 0
    %404 = vmatpush1.bf16.msra.mxu0 0
    %405 = vmatprep.subr.bf16.mxu0 0
    %406 = vmatpush1.bf16.msra.mxu0 0
    %407 = vmatprep.subr.bf16.mxu0 0
    %408 = vmatpush1.bf16.msra.mxu0 0
    %409 = vmatprep.subr.bf16.mxu0 0
    %410 = vmatpush1.bf16.msra.mxu0 0
    %411 = vmatprep.subr.bf16.mxu0 0
    %412 = vmatpush1.bf16.msra.mxu0 0
    %413 = vmatprep.subr.bf16.mxu0 0
    %414 = vmatpush1.bf16.msra.mxu0 0
    %415 = vmatprep.subr.bf16.mxu0 0
    %416 = vmatpush1.bf16.msra.mxu0 0
    %417 = vmatprep.subr.bf16.mxu0 0
    %418 = vmatpush1.bf16.msra.mxu0 0
    %419 = vmatprep.subr.bf16.mxu0 0
    %420 = vmatpush1.bf16.msra.mxu0 0
    %421 = vmatprep.subr.bf16.mxu0 0
    %422 = vmatpush1.bf16.msra.mxu0 0
    %423 = vmatprep.subr.bf16.mxu0 0
    %424 = vmatpush1.bf16.msra.mxu0 0
    %425 = vmatprep.subr.bf16.mxu0 0
    %426 = vmatpush1.bf16.msra.mxu0 0
    %427 = vmatprep.subr.bf16.mxu0 0
    %428 = vmatpush1.bf16.msra.mxu0 0
    %429 = vmatprep.subr.bf16.mxu0 0
    %430 = vmatpush1.bf16.msra.mxu0 0
    %431 = vmatprep.mubr.bf16.mxu0 0
    %432 = vmatmul.mubr.bf16.gmra.mrb[0].mxu0 %v397
    %v433 = vpop.f32.mrb[0].mxu0
    %v434 = vadd.f32 %v382, %v433
    %v435 = vpop.f32.mrb[0].mxu0
    %v436 = vpop.f32.mrb[0].mxu0
    %v437 = vpop.f32.mrb[0].mxu0
    %438 = vdwg.mxu0
    %vm439 = vcmask 17408
    %440 = vst.msk [vmem:[#allocation8] sm:$0x3] %vm439, %v434
    // Predicated region
    $region50: #{decoder_heads_forward.1} parent=1 // pred_check
      _
    $region51: #{decoder_heads_forward.1} parent=1 // pred_check_branch
      %442 = sbr.rel (0) target = $region53
    $region52: #{decoder_heads_forward.1} parent=1 // pred_region
      _
    $region53: #{decoder_heads_forward.1} parent=1 // pred_fallthru
      _
    // Predicated region
    $region54: #{decoder_heads_forward.1} parent=1 // pred_check
      _
    $region55: #{decoder_heads_forward.1} parent=1 // pred_check_branch
      %444 = sbr.rel (0) target = $region57
    $region56: #{decoder_heads_forward.1} parent=1 // pred_region
      %s446 = ssub.s32 32, 32
      %447 = vsyncadd [#allocation4], %s446
      %s449 = sshll.u32 [#allocation8], 4
      %s450 = int_to_ptr.vmem [resolvable:$true] %s449
      %452 = dma.vmem_to_hbm [thread:$0]  %s450, 32, %s10, [#allocation4]
    $region57: #{decoder_heads_forward.1} parent=1 // pred_fallthru
      _
    // Predicated region
    $region58: #{decoder_heads_forward.1} parent=1 // pred_check
      _
    $region59: #{decoder_heads_forward.1} parent=1 // pred_check_branch
      %454 = sbr.rel (0) target = $region61
    $region60: #{decoder_heads_forward.1} parent=1 // pred_region
      _
    $region61: #{decoder_heads_forward.1} parent=1 // pred_fallthru
      _
    // Predicated region
    $region62: #{decoder_heads_forward.1} parent=1 // pred_check
      _
    $region63: #{decoder_heads_forward.1} parent=1 // pred_check_branch
      %456 = sbr.rel (0) target = $region65
    $region64: #{decoder_heads_forward.1} parent=1 // pred_region
      %457 = dma.done [#allocation4], 32
    $region65: #{decoder_heads_forward.1} parent=1 // pred_fallthru
      _
    %458 = vsyncpa [#allocation3], 1
    %459 = vsyncpa [#allocation6], 1
    %460 = vsyncpa [#allocation4], 1

</llo_original>
